<compile_context>
chip_gen: v7x
topology: tpu7x:2x2x1
jax: 0.10.0
libtpu: 0.0.40
codegen_flags: <defaults>
</compile_context>

<pallas_src>
import math
from functools import partial

import jax
import jax.numpy as jnp
from jax.experimental import pallas as pl
from jax.experimental.pallas import tpu as pltpu


# -----------------------------------------------------------------------------
# Fused kernel: one grid step per batch element.
#   qkv        = x @ W_qkv                               (T, 3*H*dh)  one matmul
#   per head h:  s_h = q_h @ k_h^T + causal_bias         (dot_general, no .T)
#                stable softmax
#                y  += (att_h @ v_h) @ W_out[h*dh:(h+1)*dh, :]
#   o = y (+ b_out folded into init)                     (T, D) store
# -----------------------------------------------------------------------------
def _mha_fused_kernel(x_ref, wqkv_ref, wout_ref, bout_ref, o_ref, *, H, dh):
    x = x_ref[0]                    # (T, D)  f32
    wqkv = wqkv_ref[...]            # (D, 3*H*dh)   Q-block already pre-scaled
    wout = wout_ref[...]            # (D, D)        (in, out) layout: y = h @ wout
    bias = bout_ref[...]            # (1, D)

    T, D = x.shape

    # Single wide QKV projection for all heads.
    qkv = jnp.dot(x, wqkv, preferred_element_type=jnp.float32)   # (T, 3*H*dh)

    # Additive causal bias, shared across heads: 0 where j <= i, -inf where j > i.
    row = jax.lax.broadcasted_iota(jnp.int32, (T, T), 0)
    col = jax.lax.broadcasted_iota(jnp.int32, (T, T), 1)
    causal_bias = jnp.where(col > row, -jnp.inf, 0.0).astype(jnp.float32)

    # Accumulate the output projection directly (no explicit head concat).
    y = jnp.broadcast_to(bias, (T, D))

    for h in range(H):                                   # unrolled at trace time (H small)
        q = qkv[:, h * dh:(h + 1) * dh]                           # (T, dh) (pre-scaled)
        k = qkv[:, (H + h) * dh:(H + h + 1) * dh]                 # (T, dh)
        v = qkv[:, (2 * H + h) * dh:(2 * H + h + 1) * dh]         # (T, dh)

        # q @ k^T without materializing a transpose: contract the last dims.
        s = jax.lax.dot_general(q, k, (((1,), (1,)), ((), ())),
                                preferred_element_type=jnp.float32)   # (T, T)
        s = s + causal_bias

        # Numerically-stable softmax in f32 (diagonal always unmasked -> no 0/0).
        m = jnp.max(s, axis=-1, keepdims=True)
        p = jnp.exp(s - m)
        att = p * pl.reciprocal(jnp.sum(p, axis=-1, keepdims=True), approx=False)

        head_out = jnp.dot(att, v, preferred_element_type=jnp.float32)      # (T, dh)
        y = y + jnp.dot(head_out, wout[h * dh:(h + 1) * dh, :],
                        preferred_element_type=jnp.float32)                 # (T, D)

    o_ref[0] = y.astype(o_ref.dtype)
    # self.dropout (attention weights and output) in eval mode -> identity.


def multi_head_attention_forward(x, params):
    """x: (B, T, D); params: wq/wk/wv (H, D, dh), w_out (D, D), b_out (1, D)."""
    B, T, D = x.shape
    H, _, dh = params["wq"].shape

    # Stack all per-head projections into one (D, 3*H*dh) weight:
    # columns = [q_0 | ... | q_{H-1} | k_0 | ... | k_{H-1} | v_0 | ... | v_{H-1}]
    # The 1/sqrt(dk) query scale is folded into the Q columns (weight folding,
    # tiny one-off op on the weights, not on activations).
    def _stack(w):                      # (H, D, dh) -> (D, H*dh)
        return jnp.transpose(w, (1, 0, 2)).reshape(D, H * dh)

    inv_sqrt_dk = 1.0 / math.sqrt(dh)
    w_qkv = jnp.concatenate(
        [_stack(params["wq"]) * inv_sqrt_dk,
         _stack(params["wk"]),
         _stack(params["wv"])], axis=-1)

    kernel = partial(_mha_fused_kernel, H=H, dh=dh)

    return pl.pallas_call(
        kernel,
        out_shape=jax.ShapeDtypeStruct((B, T, D), x.dtype),
        grid_spec=pltpu.PrefetchScalarGridSpec(
            num_scalar_prefetch=0,
            grid=(B,),
            in_specs=[
                pl.BlockSpec((1, T, D), lambda b: (b, 0, 0)),          # x (per-batch tile)
                pl.BlockSpec((D, 3 * H * dh), lambda b: (0, 0)),       # W_qkv (resident)
                pl.BlockSpec((D, D), lambda b: (0, 0)),                # W_out (resident)
                pl.BlockSpec((1, D), lambda b: (0, 0)),                # b_out (resident)
            ],
            out_specs=pl.BlockSpec((1, T, D), lambda b: (b, 0, 0)),
        ),
        compiler_params=pltpu.CompilerParams(
            dimension_semantics=("parallel",)),   # grid=(B,) -> both v7x TCs busy
    )(x, w_qkv, params["w_out"], params["b_out"])


# -----------------------------------------------------------------------------
# Pure-JAX reference for validation (mirrors the PyTorch module, eval mode)
# -----------------------------------------------------------------------------
def reference_forward(x, params):
    B, T, D = x.shape
    H, _, dh = params["wq"].shape
    outs = []
    for h in range(H):
        q = (x @ params["wq"][h]) / math.sqrt(dh)
        k = x @ params["wk"][h]
        v = x @ params["wv"][h]
        s = jnp.einsum("btd,bsd->bts", q, k)
        mask = jnp.triu(jnp.ones((T, T), bool), k=1)
        s = jnp.where(mask[None], -jnp.inf, s)
        a = jax.nn.softmax(s, axis=-1)
        outs.append(jnp.einsum("bts,bsd->btd", a, v))
    concat = jnp.concatenate(outs, axis=-1)
    return concat @ params["w_out"] + params["b_out"][0]


if __name__ == "__main__":
    # Module config consistent with the PyTorch code: each head has fixed
    # key/query/value dim 16, so input_dim must equal num_heads * 16 for the
    # concat -> nn.Linear(input_dim, input_dim) to line up.
    num_heads = 2
    head_dim = 16
    input_dim = num_heads * head_dim       # 32
    batch, seq = 2, 8

    key = jax.random.PRNGKey(0)
    k_x, k_q, k_k, k_v, k_w, k_b = jax.random.split(key, 6)

    x = jax.random.normal(k_x, (batch, seq, input_dim), dtype=jnp.float32)

    # Deterministic parameter init (weights stored as (in, out) so kernels do x @ W).
    scale = 1.0 / math.sqrt(input_dim)
    params = {
        "wq": jax.random.normal(k_q, (num_heads, input_dim, head_dim), jnp.float32) * scale,
        "wk": jax.random.normal(k_k, (num_heads, input_dim, head_dim), jnp.float32) * scale,
        "wv": jax.random.normal(k_v, (num_heads, input_dim, head_dim), jnp.float32) * scale,
        "w_out": jax.random.normal(k_w, (input_dim, input_dim), jnp.float32) * scale,
        "b_out": jax.random.normal(k_b, (1, input_dim), jnp.float32) * scale,
    }

    fwd = jax.jit(multi_head_attention_forward)
    y = jax.block_until_ready(fwd(x, params))

    y_ref = reference_forward(x, params)
    assert y.shape == (batch, seq, input_dim)
    assert jnp.allclose(y, y_ref, atol=1e-4, rtol=1e-4), "mismatch vs reference"

    print("KERNEL_OK")
</pallas_src>

<mosaic_0001>
module attributes {stable_mosaic.version = 11 : i64} {
  func.func @_mha_fused_kernel(%arg0: i32, %arg1: memref<1x8x32xf32, #tpu.memory_space<vmem>>, %arg2: memref<32x96xf32, #tpu.memory_space<vmem>>, %arg3: memref<32x32xf32, #tpu.memory_space<vmem>>, %arg4: memref<1x32xf32, #tpu.memory_space<vmem>>, %arg5: memref<1x8x32xf32, #tpu.memory_space<vmem>>) attributes {dimension_semantics = [#tpu.dimension_semantics<parallel>], iteration_bounds = array<i64: 2>, scalar_prefetch = 0 : i64, scratch_operands = 0 : i64, tpu.core_type = #tpu.core_type<tc>, window_params = [{transform_indices = @transform_0, window_bounds = array<i64: 1, 8, 32>}, {pipeline_mode = #tpu.pipeline_mode<synchronous>, transform_indices = @transform_1, window_bounds = array<i64: 32, 96>}, {pipeline_mode = #tpu.pipeline_mode<synchronous>, transform_indices = @transform_2, window_bounds = array<i64: 32, 32>}, {pipeline_mode = #tpu.pipeline_mode<synchronous>, transform_indices = @transform_3, window_bounds = array<i64: 1, 32>}, {transform_indices = @transform_4, window_bounds = array<i64: 1, 8, 32>}]} {
    %c0 = arith.constant 0 : index
    %c0_0 = arith.constant 0 : index
    %c0_1 = arith.constant 0 : index
    %0 = vector.load %arg1[%c0, %c0_0, %c0_1] : memref<1x8x32xf32, #tpu.memory_space<vmem>>, vector<1x8x32xf32>
    %1 = vector.shape_cast %0 : vector<1x8x32xf32> to vector<8x32xf32>
    %c0_2 = arith.constant 0 : index
    %c0_3 = arith.constant 0 : index
    %2 = vector.load %arg2[%c0_2, %c0_3] : memref<32x96xf32, #tpu.memory_space<vmem>>, vector<32x96xf32>
    %c0_4 = arith.constant 0 : index
    %c0_5 = arith.constant 0 : index
    %3 = vector.load %arg3[%c0_4, %c0_5] : memref<32x32xf32, #tpu.memory_space<vmem>>, vector<32x32xf32>
    %c0_6 = arith.constant 0 : index
    %c0_7 = arith.constant 0 : index
    %4 = vector.load %arg4[%c0_6, %c0_7] : memref<1x32xf32, #tpu.memory_space<vmem>>, vector<1x32xf32>
    %cst = arith.constant dense<0.000000e+00> : vector<8x96xf32>
    %5 = tpu.matmul %1, %2, %cst {dimension_numbers = #tpu.dot_dimension_numbers<[1], [0], [0], [1], [0, 0, 1, 1], [], []>} : vector<8x32xf32>, vector<32x96xf32>, vector<8x96xf32> -> vector<8x96xf32>
    %6 = tpu.iota {dimensions = array<i32: 0>} : vector<8x8xi32>
    %7 = tpu.iota {dimensions = array<i32: 1>} : vector<8x8xi32>
    %8 = arith.cmpi sgt, %7, %6 : vector<8x8xi32>
    %cst_8 = arith.constant 0xFF800000 : f32
    %cst_9 = arith.constant 0.000000e+00 : f32
    %9 = vector.broadcast %cst_8 : f32 to vector<8x8xf32>
    %10 = vector.broadcast %cst_9 : f32 to vector<8x8xf32>
    %11 = arith.select %8, %9, %10 : vector<8x8xi1>, vector<8x8xf32>
    %12 = vector.shape_cast %4 : vector<1x32xf32> to vector<1x32xf32>
    %13 = vector.broadcast %12 : vector<1x32xf32> to vector<8x32xf32>
    %14 = vector.extract_strided_slice %5 {offsets = [0, 0], sizes = [8, 16], strides = [1, 1]} : vector<8x96xf32> to vector<8x16xf32>
    %15 = vector.extract_strided_slice %5 {offsets = [0, 32], sizes = [8, 16], strides = [1, 1]} : vector<8x96xf32> to vector<8x16xf32>
    %16 = vector.extract_strided_slice %5 {offsets = [0, 64], sizes = [8, 16], strides = [1, 1]} : vector<8x96xf32> to vector<8x16xf32>
    %cst_10 = arith.constant dense<0.000000e+00> : vector<8x8xf32>
    %17 = tpu.matmul %14, %15, %cst_10 {dimension_numbers = #tpu.dot_dimension_numbers<[1], [1], [0], [0], [0, 0, 1, 0], [], []>} : vector<8x16xf32>, vector<8x16xf32>, vector<8x8xf32> -> vector<8x8xf32>
    %18 = arith.addf %17, %11 : vector<8x8xf32>
    %cst_11 = arith.constant dense<0xFF800000> : vector<8xf32>
    %19 = vector.multi_reduction <maximumf>, %18, %cst_11 [1] : vector<8x8xf32> to vector<8xf32>
    %20 = vector.shape_cast %19 : vector<8xf32> to vector<8x1xf32>
    %21 = vector.broadcast %20 : vector<8x1xf32> to vector<8x8xf32>
    %22 = arith.subf %18, %21 : vector<8x8xf32>
    %23 = math.exp %22 : vector<8x8xf32>
    %cst_12 = arith.constant dense<0.000000e+00> : vector<8xf32>
    %24 = vector.multi_reduction <add>, %23, %cst_12 [1] : vector<8x8xf32> to vector<8xf32>
    %25 = vector.shape_cast %24 : vector<8xf32> to vector<8x1xf32>
    %26 = tpu.reciprocal %25 : vector<8x1xf32> -> vector<8x1xf32>
    %27 = vector.broadcast %26 : vector<8x1xf32> to vector<8x8xf32>
    %28 = arith.mulf %23, %27 : vector<8x8xf32>
    %cst_13 = arith.constant dense<0.000000e+00> : vector<8x16xf32>
    %29 = tpu.matmul %28, %16, %cst_13 {dimension_numbers = #tpu.dot_dimension_numbers<[1], [0], [0], [1], [0, 0, 1, 1], [], []>} : vector<8x8xf32>, vector<8x16xf32>, vector<8x16xf32> -> vector<8x16xf32>
    %30 = vector.extract_strided_slice %3 {offsets = [0, 0], sizes = [16, 32], strides = [1, 1]} : vector<32x32xf32> to vector<16x32xf32>
    %cst_14 = arith.constant dense<0.000000e+00> : vector<8x32xf32>
    %31 = tpu.matmul %29, %30, %cst_14 {dimension_numbers = #tpu.dot_dimension_numbers<[1], [0], [0], [1], [0, 0, 1, 1], [], []>} : vector<8x16xf32>, vector<16x32xf32>, vector<8x32xf32> -> vector<8x32xf32>
    %32 = arith.addf %13, %31 : vector<8x32xf32>
    %33 = vector.extract_strided_slice %5 {offsets = [0, 16], sizes = [8, 16], strides = [1, 1]} : vector<8x96xf32> to vector<8x16xf32>
    %34 = vector.extract_strided_slice %5 {offsets = [0, 48], sizes = [8, 16], strides = [1, 1]} : vector<8x96xf32> to vector<8x16xf32>
    %35 = vector.extract_strided_slice %5 {offsets = [0, 80], sizes = [8, 16], strides = [1, 1]} : vector<8x96xf32> to vector<8x16xf32>
    %cst_15 = arith.constant dense<0.000000e+00> : vector<8x8xf32>
    %36 = tpu.matmul %33, %34, %cst_15 {dimension_numbers = #tpu.dot_dimension_numbers<[1], [1], [0], [0], [0, 0, 1, 0], [], []>} : vector<8x16xf32>, vector<8x16xf32>, vector<8x8xf32> -> vector<8x8xf32>
    %37 = arith.addf %36, %11 : vector<8x8xf32>
    %cst_16 = arith.constant dense<0xFF800000> : vector<8xf32>
    %38 = vector.multi_reduction <maximumf>, %37, %cst_16 [1] : vector<8x8xf32> to vector<8xf32>
    %39 = vector.shape_cast %38 : vector<8xf32> to vector<8x1xf32>
    %40 = vector.broadcast %39 : vector<8x1xf32> to vector<8x8xf32>
    %41 = arith.subf %37, %40 : vector<8x8xf32>
    %42 = math.exp %41 : vector<8x8xf32>
    %cst_17 = arith.constant dense<0.000000e+00> : vector<8xf32>
    %43 = vector.multi_reduction <add>, %42, %cst_17 [1] : vector<8x8xf32> to vector<8xf32>
    %44 = vector.shape_cast %43 : vector<8xf32> to vector<8x1xf32>
    %45 = tpu.reciprocal %44 : vector<8x1xf32> -> vector<8x1xf32>
    %46 = vector.broadcast %45 : vector<8x1xf32> to vector<8x8xf32>
    %47 = arith.mulf %42, %46 : vector<8x8xf32>
    %cst_18 = arith.constant dense<0.000000e+00> : vector<8x16xf32>
    %48 = tpu.matmul %47, %35, %cst_18 {dimension_numbers = #tpu.dot_dimension_numbers<[1], [0], [0], [1], [0, 0, 1, 1], [], []>} : vector<8x8xf32>, vector<8x16xf32>, vector<8x16xf32> -> vector<8x16xf32>
    %49 = vector.extract_strided_slice %3 {offsets = [16, 0], sizes = [16, 32], strides = [1, 1]} : vector<32x32xf32> to vector<16x32xf32>
    %cst_19 = arith.constant dense<0.000000e+00> : vector<8x32xf32>
    %50 = tpu.matmul %48, %49, %cst_19 {dimension_numbers = #tpu.dot_dimension_numbers<[1], [0], [0], [1], [0, 0, 1, 1], [], []>} : vector<8x16xf32>, vector<16x32xf32>, vector<8x32xf32> -> vector<8x32xf32>
    %51 = arith.addf %32, %50 : vector<8x32xf32>
    %c0_20 = arith.constant 0 : index
    %c0_21 = arith.constant 0 : index
    %c0_22 = arith.constant 0 : index
    %52 = vector.load %arg5[%c0_20, %c0_21, %c0_22] : memref<1x8x32xf32, #tpu.memory_space<vmem>>, vector<1x8x32xf32>
    %53 = vector.shape_cast %52 : vector<1x8x32xf32> to vector<8x32xf32>
    %54 = vector.shape_cast %51 : vector<8x32xf32> to vector<1x8x32xf32>
    tpu.vector_store %arg5[%c0_20, %c0_21, %c0_22], %54 {strides = array<i32>} : memref<1x8x32xf32, #tpu.memory_space<vmem>>, vector<1x8x32xf32>,
    return
  }
  func.func @transform_0(%arg0: i32) -> (i32, i32, i32) {
    %c0_i32 = arith.constant 0 : i32
    %c0_i32_0 = arith.constant 0 : i32
    %c0_i32_1 = arith.constant 0 : i32
    return %arg0, %c0_i32, %c0_i32_0 : i32, i32, i32
  }
  func.func @transform_1(%arg0: i32) -> (i32, i32) {
    %c0_i32 = arith.constant 0 : i32
    %c0_i32_0 = arith.constant 0 : i32
    %c0_i32_1 = arith.constant 0 : i32
    return %c0_i32, %c0_i32_0 : i32, i32
  }
  func.func @transform_2(%arg0: i32) -> (i32, i32) {
    %c0_i32 = arith.constant 0 : i32
    %c0_i32_0 = arith.constant 0 : i32
    %c0_i32_1 = arith.constant 0 : i32
    return %c0_i32, %c0_i32_0 : i32, i32
  }
  func.func @transform_3(%arg0: i32) -> (i32, i32) {
    %c0_i32 = arith.constant 0 : i32
    %c0_i32_0 = arith.constant 0 : i32
    %c0_i32_1 = arith.constant 0 : i32
    return %c0_i32, %c0_i32_0 : i32, i32
  }
  func.func @transform_4(%arg0: i32) -> (i32, i32, i32) {
    %c0_i32 = arith.constant 0 : i32
    %c0_i32_0 = arith.constant 0 : i32
    %c0_i32_1 = arith.constant 0 : i32
    return %arg0, %c0_i32, %c0_i32_0 : i32, i32, i32
  }
}

</mosaic_0001>

<llo_original>
// kernel: multi_head_attention_forward.1
$region0: #{multi_head_attention_forward.1}
  #allocation0 [shape = 'u32[]', space=smem, size = 0x4, offset = 0x4, fixed_abs, tag = 'smem constant byte address 0x4 - core index']
  #allocation1 [shape = 'u32[144,128]{1,0:T(1,128)}', space=vmem, size = 0x12000, scoped, tag = 'internal scratch']
  %s0 = inlined_call_operand.vmem [shape: f32[2,8,32], index: 0, kind: input, shape index: {}]
  %s1 = inlined_call_operand.vmem [shape: f32[32,96], index: 1, kind: input, shape index: {}]
  %s2 = inlined_call_operand.vmem [shape: f32[32,32], index: 2, kind: input, shape index: {}]
  %s3 = inlined_call_operand.vmem [shape: f32[1,32], index: 3, kind: input, shape index: {}]
  %s4 = inlined_call_operand.hbm [shape: f32[2,8,32], index: 4, kind: output, shape index: {}]
  %s5 = sld [smem:[#allocation0]]
  $region49: #{multi_head_attention_forward.1} parent=0
    _
  %s7 = ssub.s32 1, %s5
  %s8 = scalar_select 0, %s7, %s5
  $region1: #{multi_head_attention_forward.1} parent=0
    #allocation2 [shape = 'u8[8192]{0}', space=vmem, size = 0x2000, scoped, tag = 'output window, operand 0']
    #allocation3 [shape = 's32[2]{0}', space=sflag, size = 0x8, scoped, tag = 'scoped memory for multi_head_attention_forward.1']
    %9 = vsyncpa [#allocation3], 0
    %s10 = scalar_lea.sflag [#allocation3], 1
    %11 = vsyncpa %s10, 0
    loop: start=0, step=1, limit=4
    $region2: #{multi_head_attention_forward.1} parent=1 // loop_pre_header
      _
    $region3: #{multi_head_attention_forward.1} parent=1 // loop_header
      %s13 = sphi 0, %s17
      %p14 = scmp.ge.s32.totalorder %s13, 4
      %s23 = sphi 0, %s25
      %s26 = sphi 0, %s23
      %s27 = sphi 0, %s26
      %s43 = sphi 0, %s27
      %s47 = sphi 0, %s47
      %s49 = sphi 0, %s47
      %s50 = sphi 0, %s49
      %s64 = sphi 0, %s50
      %s68 = sphi 0, %s68
      %s70 = sphi 0, %s68
      %s71 = sphi 0, %s70
      %s85 = sphi 0, %s71
      %s89 = sphi 0, %s89
      %s91 = sphi 0, %s89
      %s92 = sphi 0, %s91
      %s106 = sphi 0, %s92
      %s112 = sphi 0, %s114
      %s115 = sphi 0, %s112
      %s116 = sphi 0, %s115
      %s132 = sphi 0, %s116
    $region4: #{multi_head_attention_forward.1} parent=1 // loop_header_branch
      %16 = sbr.rel (%p14) target = $region8
    $region5: #{multi_head_attention_forward.1} parent=1 // loop_body
      %s18 = ssub.s32 %s13, 1
      %s19 = ssub.s32 %s13, 2
      %s20 = sadd.s32 %s13, 1
      %s21 = ssub.s32 %s13, %s20
      %p22 = scmp.eq.s32.totalorder %s21, 0
      %s24 = sadd.s32 %s23, 1
      %s25 = scalar_select %p22, %s23, %s24
      %p28 = pneg %p22
      %p29 = scmp.eq.s32.totalorder %s13, 1
      %p30 = por %p28, %p29
      %p31 = scmp.ne.s32.totalorder %s23, %s26
      %p32 = scmp.eq.s32.totalorder %s13, 0
      %p33 = por %p31, %p32
      %p34 = scmp.ne.s32.totalorder %s23, %s26
      %p35 = scmp.eq.s32.totalorder %s18, 1
      %p36 = por %p34, %p35
      %p37 = scmp.ne.s32.totalorder %s26, %s27
      %p38 = scmp.eq.s32.totalorder %s18, 0
      %p39 = por %p37, %p38
      %p40 = scmp.ne.s32.totalorder %s26, %s27
      %p41 = scmp.eq.s32.totalorder %s19, 1
      %p42 = por %p40, %p41
      %p44 = scmp.ne.s32.totalorder %s27, %s43
      %p45 = scmp.eq.s32.totalorder %s19, 0
      %p46 = por %p44, %p45
      %s48 = sadd.s32 %s47, 1
      %p51 = scmp.eq.s32.totalorder %s13, 1
      %p52 = scmp.ne.s32.totalorder %s47, %s49
      %p53 = scmp.eq.s32.totalorder %s13, 0
      %p54 = por %p52, %p53
      %p55 = scmp.ne.s32.totalorder %s47, %s49
      %p56 = scmp.eq.s32.totalorder %s18, 1
      %p57 = por %p55, %p56
      %p58 = scmp.ne.s32.totalorder %s49, %s50
      %p59 = scmp.eq.s32.totalorder %s18, 0
      %p60 = por %p58, %p59
      %p61 = scmp.ne.s32.totalorder %s49, %s50
      %p62 = scmp.eq.s32.totalorder %s19, 1
      %p63 = por %p61, %p62
      %p65 = scmp.ne.s32.totalorder %s50, %s64
      %p66 = scmp.eq.s32.totalorder %s19, 0
      %p67 = por %p65, %p66
      %s69 = sadd.s32 %s68, 1
      %p72 = scmp.eq.s32.totalorder %s13, 1
      %p73 = scmp.ne.s32.totalorder %s68, %s70
      %p74 = scmp.eq.s32.totalorder %s13, 0
      %p75 = por %p73, %p74
      %p76 = scmp.ne.s32.totalorder %s68, %s70
      %p77 = scmp.eq.s32.totalorder %s18, 1
      %p78 = por %p76, %p77
      %p79 = scmp.ne.s32.totalorder %s70, %s71
      %p80 = scmp.eq.s32.totalorder %s18, 0
      %p81 = por %p79, %p80
      %p82 = scmp.ne.s32.totalorder %s70, %s71
      %p83 = scmp.eq.s32.totalorder %s19, 1
      %p84 = por %p82, %p83
      %p86 = scmp.ne.s32.totalorder %s71, %s85
      %p87 = scmp.eq.s32.totalorder %s19, 0
      %p88 = por %p86, %p87
      %s90 = sadd.s32 %s89, 1
      %p93 = scmp.eq.s32.totalorder %s13, 1
      %p94 = scmp.ne.s32.totalorder %s89, %s91
      %p95 = scmp.eq.s32.totalorder %s13, 0
      %p96 = por %p94, %p95
      %p97 = scmp.ne.s32.totalorder %s89, %s91
      %p98 = scmp.eq.s32.totalorder %s18, 1
      %p99 = por %p97, %p98
      %p100 = scmp.ne.s32.totalorder %s91, %s92
      %p101 = scmp.eq.s32.totalorder %s18, 0
      %p102 = por %p100, %p101
      %p103 = scmp.ne.s32.totalorder %s91, %s92
      %p104 = scmp.eq.s32.totalorder %s19, 1
      %p105 = por %p103, %p104
      %p107 = scmp.ne.s32.totalorder %s92, %s106
      %p108 = scmp.eq.s32.totalorder %s19, 0
      %p109 = por %p107, %p108
      %s110 = ssub.s32 %s13, %s20
      %p111 = scmp.eq.s32.totalorder %s110, 0
      %s113 = sadd.s32 %s112, 1
      %s114 = scalar_select %p111, %s112, %s113
      %p117 = pneg %p111
      %p118 = scmp.eq.s32.totalorder %s13, 1
      %p119 = por %p117, %p118
      %p120 = scmp.ne.s32.totalorder %s112, %s115
      %p121 = scmp.eq.s32.totalorder %s13, 0
      %p122 = por %p120, %p121
      %p123 = scmp.ne.s32.totalorder %s112, %s115
      %p124 = scmp.eq.s32.totalorder %s18, 1
      %p125 = por %p123, %p124
      %p126 = scmp.ne.s32.totalorder %s115, %s116
      %p127 = scmp.eq.s32.totalorder %s18, 0
      %p128 = por %p126, %p127
      %p129 = scmp.ne.s32.totalorder %s115, %s116
      %p130 = scmp.eq.s32.totalorder %s19, 1
      %p131 = por %p129, %p130
      %p133 = scmp.ne.s32.totalorder %s116, %s132
      %p134 = scmp.eq.s32.totalorder %s19, 0
      %p135 = por %p133, %p134
      %p136 = scmp.le.s32.totalorder 1, %s13
      %p137 = scmp.lt.s32.totalorder %s13, 3
      %p138 = pnand %p136, %p137
      %p139 = pneg %p138
      // Predicated region
      $region9: #{multi_head_attention_forward.1} parent=5 // pred_check
        _
      $region10: #{multi_head_attention_forward.1} parent=5 // pred_check_branch
        %141 = sbr.rel (%p138) target = $region12
      $region11: #{multi_head_attention_forward.1} parent=5 // pred_region
        %s142 = ssub.s32 %s13, 1
        // Predicated region
        $region13: #{multi_head_attention_forward.1} parent=11 // pred_check
          %p143 = pneg %p60
        $region14: #{multi_head_attention_forward.1} parent=11 // pred_check_branch
          %145 = sbr.rel (%p143) target = $region16
        $region15: #{multi_head_attention_forward.1} parent=11 // pred_region
          _
        $region16: #{multi_head_attention_forward.1} parent=11 // pred_fallthru
          _
        // Predicated region
        $region17: #{multi_head_attention_forward.1} parent=11 // pred_check
          %p146 = pneg %p81
        $region18: #{multi_head_attention_forward.1} parent=11 // pred_check_branch
          %148 = sbr.rel (%p146) target = $region20
        $region19: #{multi_head_attention_forward.1} parent=11 // pred_region
          _
        $region20: #{multi_head_attention_forward.1} parent=11 // pred_fallthru
          _
        // Predicated region
        $region21: #{multi_head_attention_forward.1} parent=11 // pred_check
          %p149 = pneg %p102
        $region22: #{multi_head_attention_forward.1} parent=11 // pred_check_branch
          %151 = sbr.rel (%p149) target = $region24
        $region23: #{multi_head_attention_forward.1} parent=11 // pred_region
          _
        $region24: #{multi_head_attention_forward.1} parent=11 // pred_fallthru
          _
      $region12: #{multi_head_attention_forward.1} parent=5 // pred_fallthru
        _
      %p152 = scmp.lt.s32.totalorder %s13, 2
      // Predicated region
      $region25: #{multi_head_attention_forward.1} parent=5 // pred_check
        %p153 = pneg %p152
      $region26: #{multi_head_attention_forward.1} parent=5 // pred_check_branch
        %155 = sbr.rel (%p153) target = $region28
      $region27: #{multi_head_attention_forward.1} parent=5 // pred_region
        // Predicated region
        $region29: #{multi_head_attention_forward.1} parent=27 // pred_check
          %p156 = pneg %p33
        $region30: #{multi_head_attention_forward.1} parent=27 // pred_check_branch
          %158 = sbr.rel (%p156) target = $region32
        $region31: #{multi_head_attention_forward.1} parent=27 // pred_region
          %p159 = scmp.lt.s32.totalorder %s13, 1
          %s160 = scalar_select %p159, %s13, 1
          %s161 = smul.addr %s160, 8
          %s162 = scalar_lea.vmem %s0, %s161
        $region32: #{multi_head_attention_forward.1} parent=27 // pred_fallthru
          _
      $region28: #{multi_head_attention_forward.1} parent=5 // pred_fallthru
        _
      %p163 = scmp.le.s32.totalorder 1, %s13
      %p164 = scmp.lt.s32.totalorder %s13, 3
      %p165 = pnand %p163, %p164
      %p166 = pneg %p165
      // Predicated region
      $region33: #{multi_head_attention_forward.1} parent=5 // pred_check
        _
      $region34: #{multi_head_attention_forward.1} parent=5 // pred_check_branch
        %168 = sbr.rel (%p165) target = $region36
      $region35: #{multi_head_attention_forward.1} parent=5 // pred_region
        %s169 = ssub.s32 %s13, 1
        %p170 = scmp.lt.s32.totalorder %s18, 1
        %s171 = scalar_select %p170, %s18, 1
        %s172 = smul.addr %s171, 8
        %s173 = scalar_lea.vmem %s0, %s172
        %p174 = pneg %p39
        %p175 = pneg %p36
        %p176 = pneg %p60
        %p177 = pneg %p57
        %p178 = pneg %p81
        %p179 = pneg %p78
        %p180 = pneg %p102
        %p181 = pneg %p99
        %p182 = pneg %p128
        %p183 = pneg %p125
        %s184 = sand.u32 %s115, 1
        %s185 = scalar_lea.sflag [#allocation3], %s184
        %s186 = sand.u32 %s115, 1
        %s187 = smul.addr %s186, 8
        %s188 = scalar_lea.vmem [#allocation2], %s187
        %p189 = scmp.lt.s32.totalorder %s18, 1
        %s190 = scalar_select %p189, %s18, 1
        %s191 = smul.addr %s190, 8
        %s192 = scalar_lea.vmem %s0, %s191
        %v193 = vld [vmem:[%s192] sm:$0xff]
        %v194 = vld [vmem:[%s1] sm:$0xff]
        %v195 = vld [vmem:[%s1 + $0x8] sm:$0xff]
        %v196 = vld [vmem:[%s1 + $0x10] sm:$0xff]
        %v197 = vld [vmem:[%s1 + $0x18] sm:$0xff]
        %v198 = vld [vmem:[%s2] sm:$0xff]
        %v199 = vld [vmem:[%s2 + $0x8] sm:$0xff]
        %v200 = vld [vmem:[%s2 + $0x10] sm:$0xff]
        %v201 = vld [vmem:[%s2 + $0x18] sm:$0xff]
        %v202 = vld [vmem:[%s3] sm:$0x1]
        %vm203 = vcmask 261120
        %v205 = vsel %vm203, %v193, 0
        %207 = vmatprep.subr.mxu0 0.0
        %208 = vmatpush1.msra.mxu0 %v194
        %209 = vmatprep.subr.mxu0 0.0
        %210 = vmatpush1.msra.mxu0 %v195
        %211 = vmatprep.subr.mxu0 0.0
        %212 = vmatpush1.msra.mxu0 %v196
        %213 = vmatprep.subr.mxu0 0.0
        %214 = vmatpush1.msra.mxu0 %v197
        %215 = vmatprep.subr.mxu0 0.0
        %216 = vmatpush1.msra.mxu0 0.0
        %217 = vmatprep.subr.mxu0 0.0
        %218 = vmatpush1.msra.mxu0 0.0
        %219 = vmatprep.subr.mxu0 0.0
        %220 = vmatpush1.msra.mxu0 0.0
        %221 = vmatprep.subr.mxu0 0.0
        %222 = vmatpush1.msra.mxu0 0.0
        %223 = vmatprep.subr.mxu0 0.0
        %224 = vmatpush1.msra.mxu0 0.0
        %225 = vmatprep.subr.mxu0 0.0
        %226 = vmatpush1.msra.mxu0 0.0
        %227 = vmatprep.subr.mxu0 0.0
        %228 = vmatpush1.msra.mxu0 0.0
        %229 = vmatprep.subr.mxu0 0.0
        %230 = vmatpush1.msra.mxu0 0.0
        %231 = vmatprep.subr.mxu0 0.0
        %232 = vmatpush1.msra.mxu0 0.0
        %233 = vmatprep.subr.mxu0 0.0
        %234 = vmatpush1.msra.mxu0 0.0
        %235 = vmatprep.subr.mxu0 0.0
        %236 = vmatpush1.msra.mxu0 0.0
        %237 = vmatprep.subr.mxu0 0.0
        %238 = vmatpush1.msra.mxu0 0.0
        %239 = vmatprep.subr.mxu0 0.0
        %240 = vmatpush1.msra.mxu0 0.0
        %241 = vmatprep.subr.mxu0 0.0
        %242 = vmatpush1.msra.mxu0 0.0
        %243 = vmatprep.subr.mxu0 0.0
        %244 = vmatpush1.msra.mxu0 0.0
        %245 = vmatprep.subr.mxu0 0.0
        %246 = vmatpush1.msra.mxu0 0.0
        %247 = vmatprep.subr.mxu0 0.0
        %248 = vmatpush1.msra.mxu0 0.0
        %249 = vmatprep.subr.mxu0 0.0
        %250 = vmatpush1.msra.mxu0 0.0
        %251 = vmatprep.subr.mxu0 0.0
        %252 = vmatpush1.msra.mxu0 0.0
        %253 = vmatprep.subr.mxu0 0.0
        %254 = vmatpush1.msra.mxu0 0.0
        %255 = vmatprep.subr.mxu0 0.0
        %256 = vmatpush1.msra.mxu0 0.0
        %257 = vmatprep.subr.mxu0 0.0
        %258 = vmatpush1.msra.mxu0 0.0
        %259 = vmatprep.subr.mxu0 0.0
        %260 = vmatpush1.msra.mxu0 0.0
        %261 = vmatprep.subr.mxu0 0.0
        %262 = vmatpush1.msra.mxu0 0.0
        %263 = vmatprep.subr.mxu0 0.0
        %264 = vmatpush1.msra.mxu0 0.0
        %265 = vmatprep.subr.mxu0 0.0
        %266 = vmatpush1.msra.mxu0 0.0
        %267 = vmatprep.subr.mxu0 0.0
        %268 = vmatpush1.msra.mxu0 0.0
        %269 = vmatprep.subr.mxu0 0.0
        %270 = vmatpush1.msra.mxu0 0.0
        %271 = vmatprep.mubr.f32.mxu0 0.0
        %272 = vmatmul.mubr.f32.gmra.mrb[0].mxu0 %v205
        %v273 = vpop.f32.mrb[0].mxu0
        %v274 = vadd.f32 0.0, %v273
        %v275 = vpop.f32.mrb[0].mxu0
        %276 = vdwg.mxu0
        %v277 = vlaneseq
        %v278 = vshrl.u32 %v277, 7
        %v279 = vlaneseq
        %v280 = vand.u32 %v279, 127
        %vm281 = vcmp.gt.s32.totalorder %v280, %v278
        %v282 = vsel %vm281, -inf, 0.0
        %v284 = vlaneseq
        %v285 = vshrl.u32 %v284, 7
        %v286 = vsub.s32 0, %v285
        %v287 = vrot.slane %v202, %v286
        %290 = vrot.lane.b32.xlu0 %v274, 96
        %v291 = vpop.permute.xlu0 %290
        %vm292 = vcmask 130048
        %v293 = vsel %vm292, %v274, 0
        %v295 = vsel %vm292, %v291, 0
        %297 = vmatprep.subr.mxu0 0.0
        %298 = vmatpush1.xpose.msra.mxu0 %v295
        %299 = vmatprep.subr.mxu0 0.0
        %300 = vmatpush1.xpose.msra.mxu0 0.0
        %301 = vmatprep.subr.mxu0 0.0
        %302 = vmatpush1.xpose.msra.mxu0 0.0
        %303 = vmatprep.subr.mxu0 0.0
        %304 = vmatpush1.xpose.msra.mxu0 0.0
        %305 = vmatprep.subr.mxu0 0.0
        %306 = vmatpush1.xpose.msra.mxu0 0.0
        %307 = vmatprep.subr.mxu0 0.0
        %308 = vmatpush1.xpose.msra.mxu0 0.0
        %309 = vmatprep.subr.mxu0 0.0
        %310 = vmatpush1.xpose.msra.mxu0 0.0
        %311 = vmatprep.subr.mxu0 0.0
        %312 = vmatpush1.xpose.msra.mxu0 0.0
        %313 = vmatprep.subr.mxu0 0.0
        %314 = vmatpush1.xpose.msra.mxu0 0.0
        %315 = vmatprep.subr.mxu0 0.0
        %316 = vmatpush1.xpose.msra.mxu0 0.0
        %317 = vmatprep.subr.mxu0 0.0
        %318 = vmatpush1.xpose.msra.mxu0 0.0
        %319 = vmatprep.subr.mxu0 0.0
        %320 = vmatpush1.xpose.msra.mxu0 0.0
        %321 = vmatprep.subr.mxu0 0.0
        %322 = vmatpush1.xpose.msra.mxu0 0.0
        %323 = vmatprep.subr.mxu0 0.0
        %324 = vmatpush1.xpose.msra.mxu0 0.0
        %325 = vmatprep.subr.mxu0 0.0
        %326 = vmatpush1.xpose.msra.mxu0 0.0
        %327 = vmatprep.subr.mxu0 0.0
        %328 = vmatpush1.xpose.msra.mxu0 0.0
        %329 = vmatprep.subr.mxu0 0.0
        %330 = vmatpush1.xpose.msra.mxu0 0.0
        %331 = vmatprep.subr.mxu0 0.0
        %332 = vmatpush1.xpose.msra.mxu0 0.0
        %333 = vmatprep.subr.mxu0 0.0
        %334 = vmatpush1.xpose.msra.mxu0 0.0
        %335 = vmatprep.subr.mxu0 0.0
        %336 = vmatpush1.xpose.msra.mxu0 0.0
        %337 = vmatprep.subr.mxu0 0.0
        %338 = vmatpush1.xpose.msra.mxu0 0.0
        %339 = vmatprep.subr.mxu0 0.0
        %340 = vmatpush1.xpose.msra.mxu0 0.0
        %341 = vmatprep.subr.mxu0 0.0
        %342 = vmatpush1.xpose.msra.mxu0 0.0
        %343 = vmatprep.subr.mxu0 0.0
        %344 = vmatpush1.xpose.msra.mxu0 0.0
        %345 = vmatprep.subr.mxu0 0.0
        %346 = vmatpush1.xpose.msra.mxu0 0.0
        %347 = vmatprep.subr.mxu0 0.0
        %348 = vmatpush1.xpose.msra.mxu0 0.0
        %349 = vmatprep.subr.mxu0 0.0
        %350 = vmatpush1.xpose.msra.mxu0 0.0
        %351 = vmatprep.subr.mxu0 0.0
        %352 = vmatpush1.xpose.msra.mxu0 0.0
        %353 = vmatprep.subr.mxu0 0.0
        %354 = vmatpush1.xpose.msra.mxu0 0.0
        %355 = vmatprep.subr.mxu0 0.0
        %356 = vmatpush1.xpose.msra.mxu0 0.0
        %357 = vmatprep.subr.mxu0 0.0
        %358 = vmatpush1.xpose.msra.mxu0 0.0
        %359 = vmatprep.subr.mxu0 0.0
        %360 = vmatpush1.xpose.msra.mxu0 0.0
        %361 = vmatprep.mubr.f32.mxu0 0.0
        %362 = vmatmul.mubr.f32.gmra.mrb[0].mxu0 %v293
        %v363 = vpop.f32.mrb[0].mxu0
        %v364 = vadd.f32 %v282, %v363
        %v365 = vpop.f32.mrb[0].mxu0
        %366 = vdwg.mxu0
        %vm367 = vcmask 64512
        %v368 = vsel %vm367, %v364, -inf
        %369 = vmax.xlane.f32.xlu0 %v368
        %v370 = vpop.xlane.xlu0 %369
        %v371 = vsub.f32 %v364, %v370
        %v372 = vmul.f32 %v371, 1.442695
        %v373 = vpow.pop %v372
        %v374 = vsel %vm367, %v373, 0.0
        %375 = vadd.xlane.f32.xlu0 %v374
        %v376 = vpop.xlane.xlu0 %375
        %v377 = vrcp.pop %v376
        %v378 = vmul.f32 %v373, %v377
        %379 = vrot.lane.b32.xlu0 %v274, 64
        %v380 = vpop.permute.xlu0 %379
        %v383 = vsel %vm367, %v378, 0
        %385 = vmatprep.subr.mxu0 0.0
        %386 = vmatpush1.msra.mxu0 %v380
        %387 = vmatprep.subr.mxu0 0.0
        %388 = vmatpush1.msra.mxu0 0.0
        %389 = vmatprep.subr.mxu0 0.0
        %390 = vmatpush1.msra.mxu0 0.0
        %391 = vmatprep.subr.mxu0 0.0
        %392 = vmatpush1.msra.mxu0 0.0
        %393 = vmatprep.subr.mxu0 0.0
        %394 = vmatpush1.msra.mxu0 0.0
        %395 = vmatprep.subr.mxu0 0.0
        %396 = vmatpush1.msra.mxu0 0.0
        %397 = vmatprep.subr.mxu0 0.0
        %398 = vmatpush1.msra.mxu0 0.0
        %399 = vmatprep.subr.mxu0 0.0
        %400 = vmatpush1.msra.mxu0 0.0
        %401 = vmatprep.subr.mxu0 0.0
        %402 = vmatpush1.msra.mxu0 0.0
        %403 = vmatprep.subr.mxu0 0.0
        %404 = vmatpush1.msra.mxu0 0.0
        %405 = vmatprep.subr.mxu0 0.0
        %406 = vmatpush1.msra.mxu0 0.0
        %407 = vmatprep.subr.mxu0 0.0
        %408 = vmatpush1.msra.mxu0 0.0
        %409 = vmatprep.subr.mxu0 0.0
        %410 = vmatpush1.msra.mxu0 0.0
        %411 = vmatprep.subr.mxu0 0.0
        %412 = vmatpush1.msra.mxu0 0.0
        %413 = vmatprep.subr.mxu0 0.0
        %414 = vmatpush1.msra.mxu0 0.0
        %415 = vmatprep.subr.mxu0 0.0
        %416 = vmatpush1.msra.mxu0 0.0
        %417 = vmatprep.subr.mxu0 0.0
        %418 = vmatpush1.msra.mxu0 0.0
        %419 = vmatprep.subr.mxu0 0.0
        %420 = vmatpush1.msra.mxu0 0.0
        %421 = vmatprep.subr.mxu0 0.0
        %422 = vmatpush1.msra.mxu0 0.0
        %423 = vmatprep.subr.mxu0 0.0
        %424 = vmatpush1.msra.mxu0 0.0
        %425 = vmatprep.subr.mxu0 0.0
        %426 = vmatpush1.msra.mxu0 0.0
        %427 = vmatprep.subr.mxu0 0.0
        %428 = vmatpush1.msra.mxu0 0.0
        %429 = vmatprep.subr.mxu0 0.0
        %430 = vmatpush1.msra.mxu0 0.0
        %431 = vmatprep.subr.mxu0 0.0
        %432 = vmatpush1.msra.mxu0 0.0
        %433 = vmatprep.subr.mxu0 0.0
        %434 = vmatpush1.msra.mxu0 0.0
        %435 = vmatprep.subr.mxu0 0.0
        %436 = vmatpush1.msra.mxu0 0.0
        %437 = vmatprep.subr.mxu0 0.0
        %438 = vmatpush1.msra.mxu0 0.0
        %439 = vmatprep.subr.mxu0 0.0
        %440 = vmatpush1.msra.mxu0 0.0
        %441 = vmatprep.subr.mxu0 0.0
        %442 = vmatpush1.msra.mxu0 0.0
        %443 = vmatprep.subr.mxu0 0.0
        %444 = vmatpush1.msra.mxu0 0.0
        %445 = vmatprep.subr.mxu0 0.0
        %446 = vmatpush1.msra.mxu0 0.0
        %447 = vmatprep.subr.mxu0 0.0
        %448 = vmatpush1.msra.mxu0 0.0
        %449 = vmatprep.mubr.f32.mxu0 0.0
        %450 = vmatmul.mubr.f32.gmra.mrb[0].mxu0 %v383
        %v451 = vpop.f32.mrb[0].mxu0
        %v452 = vadd.f32 0.0, %v451
        %v453 = vpop.f32.mrb[0].mxu0
        %454 = vdwg.mxu0
        %v456 = vsel %vm292, %v452, 0
        %458 = vmatprep.subr.mxu0 0.0
        %459 = vmatpush1.msra.mxu0 %v198
        %460 = vmatprep.subr.mxu0 0.0
        %461 = vmatpush1.msra.mxu0 %v199
        %462 = vmatprep.subr.mxu0 0.0
        %463 = vmatpush1.msra.mxu0 0.0
        %464 = vmatprep.subr.mxu0 0.0
        %465 = vmatpush1.msra.mxu0 0.0
        %466 = vmatprep.subr.mxu0 0.0
        %467 = vmatpush1.msra.mxu0 0.0
        %468 = vmatprep.subr.mxu0 0.0
        %469 = vmatpush1.msra.mxu0 0.0
        %470 = vmatprep.subr.mxu0 0.0
        %471 = vmatpush1.msra.mxu0 0.0
        %472 = vmatprep.subr.mxu0 0.0
        %473 = vmatpush1.msra.mxu0 0.0
        %474 = vmatprep.subr.mxu0 0.0
        %475 = vmatpush1.msra.mxu0 0.0
        %476 = vmatprep.subr.mxu0 0.0
        %477 = vmatpush1.msra.mxu0 0.0
        %478 = vmatprep.subr.mxu0 0.0
        %479 = vmatpush1.msra.mxu0 0.0
        %480 = vmatprep.subr.mxu0 0.0
        %481 = vmatpush1.msra.mxu0 0.0
        %482 = vmatprep.subr.mxu0 0.0
        %483 = vmatpush1.msra.mxu0 0.0
        %484 = vmatprep.subr.mxu0 0.0
        %485 = vmatpush1.msra.mxu0 0.0
        %486 = vmatprep.subr.mxu0 0.0
        %487 = vmatpush1.msra.mxu0 0.0
        %488 = vmatprep.subr.mxu0 0.0
        %489 = vmatpush1.msra.mxu0 0.0
        %490 = vmatprep.subr.mxu0 0.0
        %491 = vmatpush1.msra.mxu0 0.0
        %492 = vmatprep.subr.mxu0 0.0
        %493 = vmatpush1.msra.mxu0 0.0
        %494 = vmatprep.subr.mxu0 0.0
        %495 = vmatpush1.msra.mxu0 0.0
        %496 = vmatprep.subr.mxu0 0.0
        %497 = vmatpush1.msra.mxu0 0.0
        %498 = vmatprep.subr.mxu0 0.0
        %499 = vmatpush1.msra.mxu0 0.0
        %500 = vmatprep.subr.mxu0 0.0
        %501 = vmatpush1.msra.mxu0 0.0
        %502 = vmatprep.subr.mxu0 0.0
        %503 = vmatpush1.msra.mxu0 0.0
        %504 = vmatprep.subr.mxu0 0.0
        %505 = vmatpush1.msra.mxu0 0.0
        %506 = vmatprep.subr.mxu0 0.0
        %507 = vmatpush1.msra.mxu0 0.0
        %508 = vmatprep.subr.mxu0 0.0
        %509 = vmatpush1.msra.mxu0 0.0
        %510 = vmatprep.subr.mxu0 0.0
        %511 = vmatpush1.msra.mxu0 0.0
        %512 = vmatprep.subr.mxu0 0.0
        %513 = vmatpush1.msra.mxu0 0.0
        %514 = vmatprep.subr.mxu0 0.0
        %515 = vmatpush1.msra.mxu0 0.0
        %516 = vmatprep.subr.mxu0 0.0
        %517 = vmatpush1.msra.mxu0 0.0
        %518 = vmatprep.subr.mxu0 0.0
        %519 = vmatpush1.msra.mxu0 0.0
        %520 = vmatprep.subr.mxu0 0.0
        %521 = vmatpush1.msra.mxu0 0.0
        %522 = vmatprep.mubr.f32.mxu0 0.0
        %523 = vmatmul.mubr.f32.gmra.mrb[0].mxu0 %v456
        %v524 = vpop.f32.mrb[0].mxu0
        %v525 = vadd.f32 0.0, %v524
        %v526 = vpop.f32.mrb[0].mxu0
        %527 = vdwg.mxu0
        %v528 = vadd.f32 %v287, %v525
        %529 = vrot.lane.b32.xlu0 %v274, 112
        %v530 = vpop.permute.xlu0 %529
        %531 = vrot.lane.b32.xlu0 %v274, 80
        %v532 = vpop.permute.xlu0 %531
        %v533 = vsel %vm292, %v530, 0
        %v535 = vsel %vm292, %v532, 0
        %537 = vmatprep.subr.mxu0 0.0
        %538 = vmatpush1.xpose.msra.mxu0 %v535
        %539 = vmatprep.subr.mxu0 0.0
        %540 = vmatpush1.xpose.msra.mxu0 0.0
        %541 = vmatprep.subr.mxu0 0.0
        %542 = vmatpush1.xpose.msra.mxu0 0.0
        %543 = vmatprep.subr.mxu0 0.0
        %544 = vmatpush1.xpose.msra.mxu0 0.0
        %545 = vmatprep.subr.mxu0 0.0
        %546 = vmatpush1.xpose.msra.mxu0 0.0
        %547 = vmatprep.subr.mxu0 0.0
        %548 = vmatpush1.xpose.msra.mxu0 0.0
        %549 = vmatprep.subr.mxu0 0.0
        %550 = vmatpush1.xpose.msra.mxu0 0.0
        %551 = vmatprep.subr.mxu0 0.0
        %552 = vmatpush1.xpose.msra.mxu0 0.0
        %553 = vmatprep.subr.mxu0 0.0
        %554 = vmatpush1.xpose.msra.mxu0 0.0
        %555 = vmatprep.subr.mxu0 0.0
        %556 = vmatpush1.xpose.msra.mxu0 0.0
        %557 = vmatprep.subr.mxu0 0.0
        %558 = vmatpush1.xpose.msra.mxu0 0.0
        %559 = vmatprep.subr.mxu0 0.0
        %560 = vmatpush1.xpose.msra.mxu0 0.0
        %561 = vmatprep.subr.mxu0 0.0
        %562 = vmatpush1.xpose.msra.mxu0 0.0
        %563 = vmatprep.subr.mxu0 0.0
        %564 = vmatpush1.xpose.msra.mxu0 0.0
        %565 = vmatprep.subr.mxu0 0.0
        %566 = vmatpush1.xpose.msra.mxu0 0.0
        %567 = vmatprep.subr.mxu0 0.0
        %568 = vmatpush1.xpose.msra.mxu0 0.0
        %569 = vmatprep.subr.mxu0 0.0
        %570 = vmatpush1.xpose.msra.mxu0 0.0
        %571 = vmatprep.subr.mxu0 0.0
        %572 = vmatpush1.xpose.msra.mxu0 0.0
        %573 = vmatprep.subr.mxu0 0.0
        %574 = vmatpush1.xpose.msra.mxu0 0.0
        %575 = vmatprep.subr.mxu0 0.0
        %576 = vmatpush1.xpose.msra.mxu0 0.0
        %577 = vmatprep.subr.mxu0 0.0
        %578 = vmatpush1.xpose.msra.mxu0 0.0
        %579 = vmatprep.subr.mxu0 0.0
        %580 = vmatpush1.xpose.msra.mxu0 0.0
        %581 = vmatprep.subr.mxu0 0.0
        %582 = vmatpush1.xpose.msra.mxu0 0.0
        %583 = vmatprep.subr.mxu0 0.0
        %584 = vmatpush1.xpose.msra.mxu0 0.0
        %585 = vmatprep.subr.mxu0 0.0
        %586 = vmatpush1.xpose.msra.mxu0 0.0
        %587 = vmatprep.subr.mxu0 0.0
        %588 = vmatpush1.xpose.msra.mxu0 0.0
        %589 = vmatprep.subr.mxu0 0.0
        %590 = vmatpush1.xpose.msra.mxu0 0.0
        %591 = vmatprep.subr.mxu0 0.0
        %592 = vmatpush1.xpose.msra.mxu0 0.0
        %593 = vmatprep.subr.mxu0 0.0
        %594 = vmatpush1.xpose.msra.mxu0 0.0
        %595 = vmatprep.subr.mxu0 0.0
        %596 = vmatpush1.xpose.msra.mxu0 0.0
        %597 = vmatprep.subr.mxu0 0.0
        %598 = vmatpush1.xpose.msra.mxu0 0.0
        %599 = vmatprep.subr.mxu0 0.0
        %600 = vmatpush1.xpose.msra.mxu0 0.0
        %601 = vmatprep.mubr.f32.mxu0 0.0
        %602 = vmatmul.mubr.f32.gmra.mrb[0].mxu0 %v533
        %v603 = vpop.f32.mrb[0].mxu0
        %v604 = vadd.f32 %v282, %v603
        %v605 = vpop.f32.mrb[0].mxu0
        %606 = vdwg.mxu0
        %v607 = vsel %vm367, %v604, -inf
        %608 = vmax.xlane.f32.xlu0 %v607
        %v609 = vpop.xlane.xlu0 %608
        %v610 = vsub.f32 %v604, %v609
        %v611 = vmul.f32 %v610, 1.442695
        %v612 = vpow.pop %v611
        %v613 = vsel %vm367, %v612, 0.0
        %614 = vadd.xlane.f32.xlu0 %v613
        %v615 = vpop.xlane.xlu0 %614
        %v616 = vrcp.pop %v615
        %v617 = vmul.f32 %v612, %v616
        %618 = vrot.lane.b32.xlu0 %v274, 48
        %v619 = vpop.permute.xlu0 %618
        %v622 = vsel %vm367, %v617, 0
        %624 = vmatprep.subr.mxu0 0.0
        %625 = vmatpush1.msra.mxu0 %v619
        %626 = vmatprep.subr.mxu0 0.0
        %627 = vmatpush1.msra.mxu0 0.0
        %628 = vmatprep.subr.mxu0 0.0
        %629 = vmatpush1.msra.mxu0 0.0
        %630 = vmatprep.subr.mxu0 0.0
        %631 = vmatpush1.msra.mxu0 0.0
        %632 = vmatprep.subr.mxu0 0.0
        %633 = vmatpush1.msra.mxu0 0.0
        %634 = vmatprep.subr.mxu0 0.0
        %635 = vmatpush1.msra.mxu0 0.0
        %636 = vmatprep.subr.mxu0 0.0
        %637 = vmatpush1.msra.mxu0 0.0
        %638 = vmatprep.subr.mxu0 0.0
        %639 = vmatpush1.msra.mxu0 0.0
        %640 = vmatprep.subr.mxu0 0.0
        %641 = vmatpush1.msra.mxu0 0.0
        %642 = vmatprep.subr.mxu0 0.0
        %643 = vmatpush1.msra.mxu0 0.0
        %644 = vmatprep.subr.mxu0 0.0
        %645 = vmatpush1.msra.mxu0 0.0
        %646 = vmatprep.subr.mxu0 0.0
        %647 = vmatpush1.msra.mxu0 0.0
        %648 = vmatprep.subr.mxu0 0.0
        %649 = vmatpush1.msra.mxu0 0.0
        %650 = vmatprep.subr.mxu0 0.0
        %651 = vmatpush1.msra.mxu0 0.0
        %652 = vmatprep.subr.mxu0 0.0
        %653 = vmatpush1.msra.mxu0 0.0
        %654 = vmatprep.subr.mxu0 0.0
        %655 = vmatpush1.msra.mxu0 0.0
        %656 = vmatprep.subr.mxu0 0.0
        %657 = vmatpush1.msra.mxu0 0.0
        %658 = vmatprep.subr.mxu0 0.0
        %659 = vmatpush1.msra.mxu0 0.0
        %660 = vmatprep.subr.mxu0 0.0
        %661 = vmatpush1.msra.mxu0 0.0
        %662 = vmatprep.subr.mxu0 0.0
        %663 = vmatpush1.msra.mxu0 0.0
        %664 = vmatprep.subr.mxu0 0.0
        %665 = vmatpush1.msra.mxu0 0.0
        %666 = vmatprep.subr.mxu0 0.0
        %667 = vmatpush1.msra.mxu0 0.0
        %668 = vmatprep.subr.mxu0 0.0
        %669 = vmatpush1.msra.mxu0 0.0
        %670 = vmatprep.subr.mxu0 0.0
        %671 = vmatpush1.msra.mxu0 0.0
        %672 = vmatprep.subr.mxu0 0.0
        %673 = vmatpush1.msra.mxu0 0.0
        %674 = vmatprep.subr.mxu0 0.0
        %675 = vmatpush1.msra.mxu0 0.0
        %676 = vmatprep.subr.mxu0 0.0
        %677 = vmatpush1.msra.mxu0 0.0
        %678 = vmatprep.subr.mxu0 0.0
        %679 = vmatpush1.msra.mxu0 0.0
        %680 = vmatprep.subr.mxu0 0.0
        %681 = vmatpush1.msra.mxu0 0.0
        %682 = vmatprep.subr.mxu0 0.0
        %683 = vmatpush1.msra.mxu0 0.0
        %684 = vmatprep.subr.mxu0 0.0
        %685 = vmatpush1.msra.mxu0 0.0
        %686 = vmatprep.subr.mxu0 0.0
        %687 = vmatpush1.msra.mxu0 0.0
        %688 = vmatprep.mubr.f32.mxu0 0.0
        %689 = vmatmul.mubr.f32.gmra.mrb[0].mxu0 %v622
        %v690 = vpop.f32.mrb[0].mxu0
        %v691 = vadd.f32 0.0, %v690
        %v692 = vpop.f32.mrb[0].mxu0
        %693 = vdwg.mxu0
        %v695 = vsel %vm292, %v691, 0
        %697 = vmatprep.subr.mxu0 0.0
        %698 = vmatpush1.msra.mxu0 %v200
        %699 = vmatprep.subr.mxu0 0.0
        %700 = vmatpush1.msra.mxu0 %v201
        %701 = vmatprep.subr.mxu0 0.0
        %702 = vmatpush1.msra.mxu0 0.0
        %703 = vmatprep.subr.mxu0 0.0
        %704 = vmatpush1.msra.mxu0 0.0
        %705 = vmatprep.subr.mxu0 0.0
        %706 = vmatpush1.msra.mxu0 0.0
        %707 = vmatprep.subr.mxu0 0.0
        %708 = vmatpush1.msra.mxu0 0.0
        %709 = vmatprep.subr.mxu0 0.0
        %710 = vmatpush1.msra.mxu0 0.0
        %711 = vmatprep.subr.mxu0 0.0
        %712 = vmatpush1.msra.mxu0 0.0
        %713 = vmatprep.subr.mxu0 0.0
        %714 = vmatpush1.msra.mxu0 0.0
        %715 = vmatprep.subr.mxu0 0.0
        %716 = vmatpush1.msra.mxu0 0.0
        %717 = vmatprep.subr.mxu0 0.0
        %718 = vmatpush1.msra.mxu0 0.0
        %719 = vmatprep.subr.mxu0 0.0
        %720 = vmatpush1.msra.mxu0 0.0
        %721 = vmatprep.subr.mxu0 0.0
        %722 = vmatpush1.msra.mxu0 0.0
        %723 = vmatprep.subr.mxu0 0.0
        %724 = vmatpush1.msra.mxu0 0.0
        %725 = vmatprep.subr.mxu0 0.0
        %726 = vmatpush1.msra.mxu0 0.0
        %727 = vmatprep.subr.mxu0 0.0
        %728 = vmatpush1.msra.mxu0 0.0
        %729 = vmatprep.subr.mxu0 0.0
        %730 = vmatpush1.msra.mxu0 0.0
        %731 = vmatprep.subr.mxu0 0.0
        %732 = vmatpush1.msra.mxu0 0.0
        %733 = vmatprep.subr.mxu0 0.0
        %734 = vmatpush1.msra.mxu0 0.0
        %735 = vmatprep.subr.mxu0 0.0
        %736 = vmatpush1.msra.mxu0 0.0
        %737 = vmatprep.subr.mxu0 0.0
        %738 = vmatpush1.msra.mxu0 0.0
        %739 = vmatprep.subr.mxu0 0.0
        %740 = vmatpush1.msra.mxu0 0.0
        %741 = vmatprep.subr.mxu0 0.0
        %742 = vmatpush1.msra.mxu0 0.0
        %743 = vmatprep.subr.mxu0 0.0
        %744 = vmatpush1.msra.mxu0 0.0
        %745 = vmatprep.subr.mxu0 0.0
        %746 = vmatpush1.msra.mxu0 0.0
        %747 = vmatprep.subr.mxu0 0.0
        %748 = vmatpush1.msra.mxu0 0.0
        %749 = vmatprep.subr.mxu0 0.0
        %750 = vmatpush1.msra.mxu0 0.0
        %751 = vmatprep.subr.mxu0 0.0
        %752 = vmatpush1.msra.mxu0 0.0
        %753 = vmatprep.subr.mxu0 0.0
        %754 = vmatpush1.msra.mxu0 0.0
        %755 = vmatprep.subr.mxu0 0.0
        %756 = vmatpush1.msra.mxu0 0.0
        %757 = vmatprep.subr.mxu0 0.0
        %758 = vmatpush1.msra.mxu0 0.0
        %759 = vmatprep.subr.mxu0 0.0
        %760 = vmatpush1.msra.mxu0 0.0
        %761 = vmatprep.mubr.f32.mxu0 0.0
        %762 = vmatmul.mubr.f32.gmra.mrb[0].mxu0 %v695
        %v763 = vpop.f32.mrb[0].mxu0
        %v764 = vadd.f32 0.0, %v763
        %v765 = vpop.f32.mrb[0].mxu0
        %766 = vdwg.mxu0
        %v767 = vadd.f32 %v528, %v764
        %768 = vst.msk [vmem:[%s188] sm:$0xff] %vm203, %v767
        %s769 = sand.u32 %s115, 1
        %s770 = scalar_lea.sflag [#allocation3], %s769
        %s771 = sand.u32 %s115, 1
        %s772 = smul.addr %s771, 8
        %s773 = scalar_lea.vmem [#allocation2], %s772
        // Predicated region
        $region37: #{multi_head_attention_forward.1} parent=35 // pred_check
          %p774 = pneg %p125
        $region38: #{multi_head_attention_forward.1} parent=35 // pred_check_branch
          %776 = sbr.rel (%p774) target = $region40
        $region39: #{multi_head_attention_forward.1} parent=35 // pred_region
          %s778 = ssub.s32 128, 128
          %779 = vsyncadd %s770, %s778
          %s780 = smul.addr %s18, 128
          %s781 = scalar_lea.hbm %s4, %s780
          %s783 = sshll.u32 %s773, 4
          %s784 = int_to_ptr.vmem [resolvable:$true] %s783
          %786 = dma.vmem_to_hbm [thread:$0]  %s784, 128, %s781, %s770
        $region40: #{multi_head_attention_forward.1} parent=35 // pred_fallthru
          _
      $region36: #{multi_head_attention_forward.1} parent=5 // pred_fallthru
        _
      %p787 = scmp.le.s32.totalorder 2, %s13
      // Predicated region
      $region41: #{multi_head_attention_forward.1} parent=5 // pred_check
        %p788 = pneg %p787
      $region42: #{multi_head_attention_forward.1} parent=5 // pred_check_branch
        %790 = sbr.rel (%p788) target = $region44
      $region43: #{multi_head_attention_forward.1} parent=5 // pred_region
        %s791 = ssub.s32 %s13, 2
        // Predicated region
        $region45: #{multi_head_attention_forward.1} parent=43 // pred_check
          %p792 = pneg %p131
        $region46: #{multi_head_attention_forward.1} parent=43 // pred_check_branch
          %794 = sbr.rel (%p792) target = $region48
        $region47: #{multi_head_attention_forward.1} parent=43 // pred_region
          %s795 = sand.u32 %s116, 1
          %s796 = scalar_lea.sflag [#allocation3], %s795
          %s797 = sand.u32 %s116, 1
          %s798 = smul.addr %s797, 8
          %s799 = scalar_lea.vmem [#allocation2], %s798
          %800 = dma.done %s796, 128
        $region48: #{multi_head_attention_forward.1} parent=43 // pred_fallthru
          _
      $region44: #{multi_head_attention_forward.1} parent=5 // pred_fallthru
        _
    $region6: #{multi_head_attention_forward.1} parent=1 // loop_footer
      %s17 = sadd.s32 1, %s13
    $region7: #{multi_head_attention_forward.1} parent=1 // loop_footer_branch
      %12 = sbr.rel target = $region3
    $region8: #{multi_head_attention_forward.1} parent=1 // loop_exit
      _
    %801 = vsyncpa [#allocation3], 1
    %s802 = scalar_lea.sflag [#allocation3], 1
    %803 = vsyncpa %s802, 1

</llo_original>
